<compile_context>
chip_gen: v6e
topology: v6e:2x2x1
jax: 0.10.0
libtpu: 0.0.40
codegen_flags: <defaults>
</compile_context>

<pallas_src>
import functools

import jax
import jax.numpy as jnp
from jax.experimental import pallas as pl
from jax.experimental.pallas import tpu as pltpu


def _entropy_partial_kernel(x_ref, o_ref, *, total_b, tb, tiles_per_split, needs_mask):
    split = pl.program_id(0)          # 'parallel' axis (TensorCore split)
    i = pl.program_id(1)              # 'arbitrary' axis (batch-tile reduction)

    @pl.when(i == 0)
    def _init():
        o_ref[...] = jnp.zeros_like(o_ref)

    x = x_ref[...].astype(jnp.float32)                          # (TB, C)
    row_base = (split * tiles_per_split + i) * tb

    if needs_mask:
        # Rows past the true batch size (ragged / overhanging tiles): zero them so exp
        # stays finite; they receive zero weight in the MXU reduction below.
        row_ids = jax.lax.broadcasted_iota(jnp.int32, (tb, 1), 0) + row_base
        x = jnp.where(row_ids < total_b, x, 0.0)

    # Numerically-stable row-softmax statistics (softmax itself is never materialized).
    m = jnp.max(x, axis=1, keepdims=True)                       # (TB, 1)
    e = jnp.exp(x - m)                                          # (TB, C)
    s = jnp.sum(e, axis=1, keepdims=True)                       # (TB, 1)
    r = pl.reciprocal(s, approx=False)                          # exact 1/s

    # Fold 1/s (and the validity mask) into the (1, TB) MXU weights:
    #   acc_c += sum_b w_b * e_bc  with  w_b = valid_b / s_b
    w = jnp.reshape(r, (1, tb))                                 # sublane->lane relayout
    if needs_mask:
        col_ids = jax.lax.broadcasted_iota(jnp.int32, (1, tb), 1) + row_base
        w = jnp.where(col_ids < total_b, w, 0.0)

    o_ref[...] += jnp.dot(w, e, preferred_element_type=jnp.float32)[None]   # (1, 1, C)


def entropy_loss_ref(x):
    """Pure-JAX reference mirroring the PyTorch module (for verification)."""
    p = jax.nn.softmax(x.astype(jnp.float32), axis=1)
    pm = jnp.mean(p, axis=0)
    return -jnp.sum(pm * jnp.log(pm + 1e-6))


def _vmem_capacity_bytes():
    try:
        return int(pltpu.get_tpu_info().vmem_capacity_bytes)
    except Exception:
        return 64 << 20   # conservative fallback (v7x per-TC physical VMEM)


def entropy_loss(x, *, tb=None, n_split=None, force_pallas=False):
    """Pallas TPU implementation of EntropyLoss.forward for logits x of shape (B, C)."""
    B, C = x.shape

    if not force_pallas and B * C < (1 << 14):
        # Tiny problem (e.g. 8x32): pallas_call launch + per-step overhead dominate;
        # use pure JAX (or fuse the loss into the kernel that produces the logits).
        return entropy_loss_ref(x)

    vmem_bytes = _vmem_capacity_bytes()

    if tb is None:
        # Budget: 2x double-buffered input tile + ~3 f32 (TB, C) in-kernel temporaries.
        budget = int(vmem_bytes * 0.6)
        per_row = C * (2 * x.dtype.itemsize + 3 * 4)
        tb = budget // max(per_row, 1)
        tb = max(8, min(1024, (tb // 8) * 8))
    tb = min(tb, B)

    n_tiles = pl.cdiv(B, tb)
    if n_split is None:
        n_split = 2 if n_tiles >= 2 else 1     # v7x: 2 TCs; neutral on 1-TC v5e/v6e
    n_split = max(1, min(n_split, n_tiles))
    tiles_per_split = pl.cdiv(n_tiles, n_split)
    # Masking only needed when the grid does not cover exactly B rows.
    needs_mask = (n_split * tiles_per_split * tb != B)

    last_tile = n_tiles - 1

    def x_index_map(s, i):
        # Clamp overhanging tiles (entirely past B) onto the last real tile; their rows
        # are masked inside the kernel, so they contribute nothing.
        return (jnp.minimum(s * tiles_per_split + i, last_tile), 0)

    kernel = functools.partial(
        _entropy_partial_kernel,
        total_b=B, tb=tb, tiles_per_split=tiles_per_split, needs_mask=needs_mask)

    partial = pl.pallas_call(
        kernel,
        out_shape=jax.ShapeDtypeStruct((n_split, 1, C), jnp.float32),
        grid_spec=pltpu.PrefetchScalarGridSpec(
            num_scalar_prefetch=0,
            grid=(n_split, tiles_per_split),
            in_specs=[pl.BlockSpec((tb, C), x_index_map)],
            out_specs=pl.BlockSpec((1, 1, C), lambda s, i: (s, 0, 0)),
        ),
        compiler_params=pltpu.CompilerParams(
            dimension_semantics=("parallel", "arbitrary"),
            vmem_limit_bytes=int(min(vmem_bytes * 0.85, vmem_bytes - (4 << 20))),
        ),
    )(x)

    # Tiny finalize (C elements): combine per-core partial class-sums, mean over the
    # true B, entropy.  Kept in the wrapper so each TensorCore only emits a partial sum.
    p_mean = jnp.sum(partial[:, 0, :], axis=0) * (1.0 / B)
    return -jnp.sum(p_mean * jnp.log(p_mean + 1e-6))


if __name__ == "__main__":
    key = jax.random.PRNGKey(0)
    k1, k2, k3, k4 = jax.random.split(key, 4)

    # 1) Module's typical tiny logits (batch=8, classes=32). Auto-dispatch would use the
    #    pure-JAX path here, so force the kernel to exercise it.
    x1 = jax.random.normal(k1, (8, 32), dtype=jnp.float32)
    out1 = jax.block_until_ready(entropy_loss(x1, force_pallas=True))
    ref1 = entropy_loss_ref(x1)
    assert jnp.allclose(out1, ref1, atol=1e-5, rtol=1e-5), (out1, ref1)

    # 2) Multi-tile grid, 2-way core split, ragged last tile + overhang clamp.
    x2 = jax.random.normal(k2, (300, 160), dtype=jnp.float32)
    out2 = jax.block_until_ready(entropy_loss(x2, tb=128, force_pallas=True))
    ref2 = entropy_loss_ref(x2)
    assert jnp.allclose(out2, ref2, atol=1e-5, rtol=1e-5), (out2, ref2)

    # 3) bf16 logits, exact tile split (no masking on any step; f32 compute in-kernel).
    x3 = jax.random.normal(k3, (64, 128), dtype=jnp.bfloat16)
    out3 = jax.block_until_ready(entropy_loss(x3, tb=32, force_pallas=True))
    ref3 = entropy_loss_ref(x3)
    assert jnp.allclose(out3, ref3, atol=1e-4, rtol=1e-4), (out3, ref3)

    # 4) Auto tile-size / auto split path.
    x4 = jax.random.normal(k4, (1024, 256), dtype=jnp.float32)
    out4 = jax.block_until_ready(entropy_loss(x4))
    ref4 = entropy_loss_ref(x4)
    assert jnp.allclose(out4, ref4, atol=1e-5, rtol=1e-5), (out4, ref4)

    print("KERNEL_OK")
</pallas_src>

<mosaic_0001>
module attributes {stable_mosaic.version = 11 : i64} {
  func.func @_entropy_partial_kernel(%arg0: i32, %arg1: i32, %arg2: memref<8x32xf32, #tpu.memory_space<vmem>>, %arg3: memref<1x1x32xf32, #tpu.memory_space<vmem>>) attributes {dimension_semantics = [#tpu.dimension_semantics<parallel>, #tpu.dimension_semantics<arbitrary>], iteration_bounds = array<i64: 1, 1>, scalar_prefetch = 0 : i64, scratch_operands = 0 : i64, tpu.core_type = #tpu.core_type<tc>, window_params = [{transform_indices = @transform_0, window_bounds = array<i64: 8, 32>}, {transform_indices = @transform_1, window_bounds = array<i64: 1, 1, 32>}]} {
    %c0_i32 = arith.constant 0 : i32
    %0 = arith.cmpi eq, %arg1, %c0_i32 : i32
    %1 = arith.extui %0 : i1 to i32
    %c0_i32_0 = arith.constant 0 : i32
    %2 = arith.cmpi ne, %1, %c0_i32_0 : i32
    scf.if %2 {
      %cst_10 = arith.constant 0.000000e+00 : f32
      %18 = vector.broadcast %cst_10 : f32 to vector<1x1x32xf32>
      %c0_11 = arith.constant 0 : index
      %c0_12 = arith.constant 0 : index
      %c0_13 = arith.constant 0 : index
      %19 = vector.load %arg3[%c0_11, %c0_12, %c0_13] : memref<1x1x32xf32, #tpu.memory_space<vmem>>, vector<1x1x32xf32>
      tpu.vector_store %arg3[%c0_11, %c0_12, %c0_13], %18 {strides = array<i32>} : memref<1x1x32xf32, #tpu.memory_space<vmem>>, vector<1x1x32xf32>,
    } else {
    }
    %c0 = arith.constant 0 : index
    %c0_1 = arith.constant 0 : index
    %3 = vector.load %arg2[%c0, %c0_1] : memref<8x32xf32, #tpu.memory_space<vmem>>, vector<8x32xf32>
    %cst = arith.constant dense<0xFF800000> : vector<8xf32>
    %4 = vector.multi_reduction <maximumf>, %3, %cst [1] : vector<8x32xf32> to vector<8xf32>
    %5 = vector.shape_cast %4 : vector<8xf32> to vector<8x1xf32>
    %6 = vector.broadcast %5 : vector<8x1xf32> to vector<8x32xf32>
    %7 = arith.subf %3, %6 : vector<8x32xf32>
    %8 = math.exp %7 : vector<8x32xf32>
    %cst_2 = arith.constant dense<0.000000e+00> : vector<8xf32>
    %9 = vector.multi_reduction <add>, %8, %cst_2 [1] : vector<8x32xf32> to vector<8xf32>
    %10 = vector.shape_cast %9 : vector<8xf32> to vector<8x1xf32>
    %11 = tpu.reciprocal %10 : vector<8x1xf32> -> vector<8x1xf32>
    %12 = vector.shape_cast %11 : vector<8x1xf32> to vector<1x8xf32>
    %c0_3 = arith.constant 0 : index
    %c0_4 = arith.constant 0 : index
    %c0_5 = arith.constant 0 : index
    %13 = vector.load %arg3[%c0_3, %c0_4, %c0_5] : memref<1x1x32xf32, #tpu.memory_space<vmem>>, vector<1x1x32xf32>
    %cst_6 = arith.constant dense<0.000000e+00> : vector<1x32xf32>
    %14 = tpu.matmul %12, %8, %cst_6 {dimension_numbers = #tpu.dot_dimension_numbers<[1], [0], [0], [1], [0, 0, 1, 1], [], []>} : vector<1x8xf32>, vector<8x32xf32>, vector<1x32xf32> -> vector<1x32xf32>
    %15 = vector.shape_cast %14 : vector<1x32xf32> to vector<1x1x32xf32>
    %16 = arith.addf %13, %15 : vector<1x1x32xf32>
    %c0_7 = arith.constant 0 : index
    %c0_8 = arith.constant 0 : index
    %c0_9 = arith.constant 0 : index
    %17 = vector.load %arg3[%c0_7, %c0_8, %c0_9] : memref<1x1x32xf32, #tpu.memory_space<vmem>>, vector<1x1x32xf32>
    tpu.vector_store %arg3[%c0_7, %c0_8, %c0_9], %16 {strides = array<i32>} : memref<1x1x32xf32, #tpu.memory_space<vmem>>, vector<1x1x32xf32>,
    return
  }
  func.func @transform_0(%arg0: i32, %arg1: i32) -> (i32, i32) {
    %c1_i32 = arith.constant 1 : i32
    %0 = arith.muli %arg0, %c1_i32 : i32
    %1 = arith.addi %0, %arg1 : i32
    %c0_i32 = arith.constant 0 : i32
    %2 = arith.minsi %1, %c0_i32 : i32
    %c0_i32_0 = arith.constant 0 : i32
    %c0_i32_1 = arith.constant 0 : i32
    return %2, %c0_i32_0 : i32, i32
  }
  func.func @transform_1(%arg0: i32, %arg1: i32) -> (i32, i32, i32) {
    %c0_i32 = arith.constant 0 : i32
    %c0_i32_0 = arith.constant 0 : i32
    %c0_i32_1 = arith.constant 0 : i32
    return %arg0, %c0_i32, %c0_i32_0 : i32, i32, i32
  }
}

</mosaic_0001>

<llo_original>
// kernel: tpu_custom_call.1
$region0: #{tpu_custom_call.1}
  #allocation0 [shape = 'u32[]', space=smem, size = 0x4, offset = 0x4, fixed_abs, tag = 'smem constant byte address 0x4 - core index']
  #allocation1 [shape = 'u32[144,128]{1,0:T(1,128)}', space=vmem, size = 0x12000, scoped, tag = 'internal scratch']
  %s0 = inlined_call_operand.hbm [shape: f32[8,32], index: 0, kind: input, shape index: {}]
  %s1 = inlined_call_operand.hbm [shape: f32[1,1,32], index: 1, kind: output, shape index: {}]
  %s2 = sld [smem:[#allocation0]]
  $region22: #{tpu_custom_call.1} parent=0
    _
  %s4 = ssub.s32 1, %s2
  %s5 = scalar_select 0, %s4, %s2
  $region1: #{tpu_custom_call.1} parent=0
    #allocation2 [shape = 'u8[4096]{0}', space=vmem, size = 0x1000, scoped, tag = 'input window, operand 0, single buffered']
    #allocation3 [shape = 's32[1]{0}', space=sflag, size = 0x4, scoped, tag = 'scoped memory for tpu_custom_call.1']
    #allocation4 [shape = 's32[1]{0}', space=sflag, size = 0x4, scoped, tag = 'scoped memory for tpu_custom_call.1']
    #allocation5 [shape = 'u8[512]{0}', space=vmem, size = 0x400, scoped, tag = 'output window, operand 0, single buffered']
    %6 = vsyncpa [#allocation3], 0
    %7 = vsyncpa [#allocation4], 0
    // Predicated region
    $region2: #{tpu_custom_call.1} parent=1 // pred_check
      _
    $region3: #{tpu_custom_call.1} parent=1 // pred_check_branch
      %9 = sbr.rel (0) target = $region5
    $region4: #{tpu_custom_call.1} parent=1 // pred_region
      %s10 = sadd.s32 0, 0
      %p11 = scmp.lt.s32.totalorder %s10, 0
      %s12 = scalar_select %p11, %s10, 0
      %s14 = ssub.s32 128, 128
      %15 = vsyncadd [#allocation3], %s14
      %s16 = smul.addr %s12, 128
      %s17 = scalar_lea.hbm %s0, %s16
      %s19 = sshll.u32 [#allocation2], 4
      %s20 = int_to_ptr.vmem [resolvable:$true] %s19
      %22 = dma.hbm_to_vmem [thread:$0]  %s17, 128, %s20, [#allocation3]
    $region5: #{tpu_custom_call.1} parent=1 // pred_fallthru
      _
    // Predicated region
    $region6: #{tpu_custom_call.1} parent=1 // pred_check
      _
    $region7: #{tpu_custom_call.1} parent=1 // pred_check_branch
      %24 = sbr.rel (0) target = $region9
    $region8: #{tpu_custom_call.1} parent=1 // pred_region
      %25 = dma.done [#allocation3], 128
    $region9: #{tpu_custom_call.1} parent=1 // pred_fallthru
      _
    %s26 = sadd.s32 0, 0
    %p27 = scmp.lt.s32.totalorder %s26, 0
    %s28 = scalar_select %p27, %s26, 0
    %p29 = scmp.eq.s32.totalorder 0, 0
    // Predicated region
    $region10: #{tpu_custom_call.1} parent=1 // pred_check
      %p30 = pneg %p29
    $region11: #{tpu_custom_call.1} parent=1 // pred_check_branch
      %32 = sbr.rel (%p30) target = $region13
    $region12: #{tpu_custom_call.1} parent=1 // pred_region
      %vm33 = vcmask 253952
      %34 = vst.msk [vmem:[#allocation5] sm:$0x1] %vm33, 0.0
    $region13: #{tpu_custom_call.1} parent=1 // pred_fallthru
      _
    %v35 = vld [vmem:[#allocation2] sm:$0xff]
    %vm36 = vcmask 261120
    %v37 = vsel %vm36, %v35, -inf
    %38 = vmax.xlane.f32.xlu0 %v37
    %v39 = vpop.xlane.xlu0 %38
    %v40 = vsub.f32 %v35, %v39
    %v41 = vmul.f32 %v40, 1.442695
    %v42 = vpow.pop %v41
    %v43 = vsel %vm36, %v42, 0.0
    %44 = vadd.xlane.f32.xlu0 %v43
    %v45 = vpop.xlane.xlu0 %44
    %v46 = vrcp.pop %v45
    %v47 = vld [vmem:[#allocation5] sm:$0x1]
    %v49 = vlaneseq
    %v50 = vand.u32 %v49, 127
    %v51 = vlaneseq
    %v52 = vshrl.u32 %v51, 7
    %v53 = vsub.s32 %v50, %v52
    %v54 = vrot.slane %v46, %v53
    %vm55 = vcmask 64512
    %v56 = vsel %vm55, %v54, 0
    %58 = vmatprep.subr.mxu0 0.0
    %59 = vmatpush1.msra.mxu0 0.0
    %60 = vmatprep.subr.mxu0 0.0
    %61 = vmatpush1.msra.mxu0 0.0
    %62 = vmatprep.subr.mxu0 0.0
    %63 = vmatpush1.msra.mxu0 0.0
    %64 = vmatprep.subr.mxu0 0.0
    %65 = vmatpush1.msra.mxu0 0.0
    %66 = vmatprep.subr.mxu0 0.0
    %67 = vmatpush1.msra.mxu0 0.0
    %68 = vmatprep.subr.mxu0 0.0
    %69 = vmatpush1.msra.mxu0 0.0
    %70 = vmatprep.subr.mxu0 0.0
    %71 = vmatpush1.msra.mxu0 0.0
    %72 = vmatprep.subr.mxu0 0.0
    %73 = vmatpush1.msra.mxu0 0.0
    %74 = vmatprep.subr.mxu0 0.0
    %75 = vmatpush1.msra.mxu0 0.0
    %76 = vmatprep.subr.mxu0 0.0
    %77 = vmatpush1.msra.mxu0 0.0
    %78 = vmatprep.subr.mxu0 0.0
    %79 = vmatpush1.msra.mxu0 0.0
    %80 = vmatprep.subr.mxu0 0.0
    %81 = vmatpush1.msra.mxu0 0.0
    %82 = vmatprep.subr.mxu0 0.0
    %83 = vmatpush1.msra.mxu0 0.0
    %84 = vmatprep.subr.mxu0 0.0
    %85 = vmatpush1.msra.mxu0 0.0
    %86 = vmatprep.subr.mxu0 0.0
    %87 = vmatpush1.msra.mxu0 0.0
    %88 = vmatprep.subr.mxu0 0.0
    %89 = vmatpush1.msra.mxu0 %v42
    %90 = vmatprep.subr.mxu0 0.0
    %91 = vmatpush2.msra.mxu0 0.0
    %92 = vmatprep.subr.mxu0 0.0
    %93 = vmatpush2.msra.mxu0 0.0
    %94 = vmatprep.subr.mxu0 0.0
    %95 = vmatpush2.msra.mxu0 0.0
    %96 = vmatprep.subr.mxu0 0.0
    %97 = vmatpush2.msra.mxu0 0.0
    %98 = vmatprep.subr.mxu0 0.0
    %99 = vmatpush2.msra.mxu0 0.0
    %100 = vmatprep.subr.mxu0 0.0
    %101 = vmatpush2.msra.mxu0 0.0
    %102 = vmatprep.subr.mxu0 0.0
    %103 = vmatpush2.msra.mxu0 0.0
    %104 = vmatprep.subr.mxu0 0.0
    %105 = vmatpush2.msra.mxu0 0.0
    %106 = vmatprep.subr.mxu0 0.0
    %107 = vmatpush2.msra.mxu0 0.0
    %108 = vmatprep.subr.mxu0 0.0
    %109 = vmatpush2.msra.mxu0 0.0
    %110 = vmatprep.subr.mxu0 0.0
    %111 = vmatpush2.msra.mxu0 0.0
    %112 = vmatprep.subr.mxu0 0.0
    %113 = vmatpush2.msra.mxu0 0.0
    %114 = vmatprep.subr.mxu0 0.0
    %115 = vmatpush2.msra.mxu0 0.0
    %116 = vmatprep.subr.mxu0 0.0
    %117 = vmatpush2.msra.mxu0 0.0
    %118 = vmatprep.subr.mxu0 0.0
    %119 = vmatpush2.msra.mxu0 0.0
    %120 = vmatprep.subr.mxu0 0.0
    %121 = vmatpush2.msra.mxu0 0.0
    %122 = vmatprep.mubr.f32.mxu0 0.0
    %123 = vmatmul.mubr.f32.gmra.mxu0 %v56
    %v124 = vpop.f32.mrf.mxu0
    %v125 = vadd.f32 0.0, %v124
    %v126 = vpop.f32.mrf.mxu0
    %127 = vdwg.mxu0
    %v128 = vadd.f32 %v47, %v125
    %vm129 = vcmask 253952
    %130 = vst.msk [vmem:[#allocation5] sm:$0x1] %vm129, %v128
    // Predicated region
    $region14: #{tpu_custom_call.1} parent=1 // pred_check
      _
    $region15: #{tpu_custom_call.1} parent=1 // pred_check_branch
      %132 = sbr.rel (0) target = $region17
    $region16: #{tpu_custom_call.1} parent=1 // pred_region
      %s134 = ssub.s32 16, 16
      %135 = vsyncadd [#allocation4], %s134
      %s137 = sshll.u32 [#allocation5], 4
      %s138 = int_to_ptr.vmem [resolvable:$true] %s137
      %140 = dma.vmem_to_hbm [thread:$0]  %s138, 16, %s1, [#allocation4]
    $region17: #{tpu_custom_call.1} parent=1 // pred_fallthru
      _
    // Predicated region
    $region18: #{tpu_custom_call.1} parent=1 // pred_check
      _
    $region19: #{tpu_custom_call.1} parent=1 // pred_check_branch
      %142 = sbr.rel (0) target = $region21
    $region20: #{tpu_custom_call.1} parent=1 // pred_region
      %143 = dma.done [#allocation4], 16
    $region21: #{tpu_custom_call.1} parent=1 // pred_fallthru
      _
    %144 = vsyncpa [#allocation3], 1
    %145 = vsyncpa [#allocation4], 1

</llo_original>
